<compile_context>
chip_gen: v5e
topology: v5e:2x2
jax: 0.10.0
libtpu: 0.0.40
codegen_flags: <defaults>
</compile_context>

<pallas_src>
import jax
import jax.numpy as jnp
from jax.experimental import pallas as pl
from jax.experimental.pallas import tpu as pltpu


def linear_kernel(x_ref, w_ref, b_ref, o_ref):
    # x_ref: (B, K)  activations (one (8,128)-padded VMEM tile)
    # w_ref: (K, N)  weight, pre-transposed once at parameter-load time
    # b_ref: (1, N)  bias
    # o_ref: (B, N)  output (single masked store; fine for a no-grid kernel)
    acc = jnp.dot(x_ref[...], w_ref[...], preferred_element_type=jnp.float32)
    o_ref[...] = (acc + b_ref[...].astype(jnp.float32)).astype(o_ref.dtype)


def linear_pallas(x, w_t, b2):
    B = x.shape[0]
    N = w_t.shape[1]
    return pl.pallas_call(
        linear_kernel,
        out_shape=jax.ShapeDtypeStruct((B, N), x.dtype),
        in_specs=[
            pl.BlockSpec(memory_space=pltpu.MemorySpace.VMEM),
            pl.BlockSpec(memory_space=pltpu.MemorySpace.VMEM),
            pl.BlockSpec(memory_space=pltpu.MemorySpace.VMEM),
        ],
        out_specs=pl.BlockSpec(memory_space=pltpu.MemorySpace.VMEM),
    )(x, w_t, b2)


def prepare_params(w, b):
    """One-time parameter prep, OUTSIDE the per-call jitted path.

    PyTorch nn.Linear stores weight as (out_features, in_features); the kernel
    consumes it pre-transposed as (K, N) so the forward pass issues no
    transpose/pad/slice dispatches at all.
    """
    w_t = jnp.transpose(w)          # (K, N)
    b2 = b.reshape(1, -1)           # (1, N)
    return w_t, b2


@jax.jit
def model_forward(x, w_t, b2):
    """y = x @ w.T + b  (PyTorch nn.Linear semantics), params pre-prepared."""
    return linear_pallas(x, w_t, b2)
    # NOTE: if B ever grows large (>= ~1024), switch to batch-only tiling:
    # grid=(pl.cdiv(B, TILE_B),) with BlockSpec((TILE_B, K)) for x and
    # (TILE_B, N) for the output, keep the weight resident, and mark the batch
    # axis "parallel" so v7x shards it across its two TensorCores (size TILE_B
    # against v7x's 64 MiB VMEM / 32 MiB scoped default with double-buffered
    # x and out tiles).


if __name__ == "__main__":
    input_size = 32
    batch = 8
    out_features = 2  # nn.Linear(input_size, 2)

    key = jax.random.PRNGKey(0)
    kx, kw, kb = jax.random.split(key, 3)

    # Deterministic parameter init (mimics nn.Linear's uniform(-1/sqrt(K), 1/sqrt(K)))
    bound = 1.0 / jnp.sqrt(jnp.float32(input_size))
    w = jax.random.uniform(kw, (out_features, input_size), jnp.float32, -bound, bound)
    b = jax.random.uniform(kb, (out_features,), jnp.float32, -bound, bound)

    x = jax.random.normal(kx, (batch, input_size), jnp.float32)

    # One-time parameter prep (not in the per-call path).
    w_t, b2 = prepare_params(w, b)
    w_t, b2 = jax.block_until_ready((w_t, b2))

    y = model_forward(x, w_t, b2)
    y = jax.block_until_ready(y)

    # Reference check against plain JAX (same math as torch F.linear)
    y_ref = x @ w.T + b
    assert y.shape == (batch, out_features)
    assert jnp.allclose(y, y_ref, atol=1e-5, rtol=1e-5), "mismatch vs reference"

    print("KERNEL_OK")
</pallas_src>

<mosaic_0001>
module attributes {stable_mosaic.version = 11 : i64} {
  func.func @linear_kernel(%arg0: memref<8x32xf32, #tpu.memory_space<vmem>>, %arg1: memref<32x2xf32, #tpu.memory_space<vmem>>, %arg2: memref<1x2xf32, #tpu.memory_space<vmem>>, %arg3: memref<8x2xf32, #tpu.memory_space<vmem>>) attributes {dimension_semantics = [], scalar_prefetch = 0 : i64, scratch_operands = 0 : i64, tpu.core_type = #tpu.core_type<tc>} {
    %c0 = arith.constant 0 : index
    %c0_0 = arith.constant 0 : index
    %0 = vector.load %arg0[%c0, %c0_0] : memref<8x32xf32, #tpu.memory_space<vmem>>, vector<8x32xf32>
    %c0_1 = arith.constant 0 : index
    %c0_2 = arith.constant 0 : index
    %1 = vector.load %arg1[%c0_1, %c0_2] : memref<32x2xf32, #tpu.memory_space<vmem>>, vector<32x2xf32>
    %cst = arith.constant dense<0.000000e+00> : vector<8x2xf32>
    %2 = tpu.matmul %0, %1, %cst {dimension_numbers = #tpu.dot_dimension_numbers<[1], [0], [0], [1], [0, 0, 1, 1], [], []>} : vector<8x32xf32>, vector<32x2xf32>, vector<8x2xf32> -> vector<8x2xf32>
    %c0_3 = arith.constant 0 : index
    %c0_4 = arith.constant 0 : index
    %3 = vector.load %arg2[%c0_3, %c0_4] : memref<1x2xf32, #tpu.memory_space<vmem>>, vector<1x2xf32>
    %4 = vector.broadcast %3 : vector<1x2xf32> to vector<8x2xf32>
    %5 = arith.addf %2, %4 : vector<8x2xf32>
    %c0_5 = arith.constant 0 : index
    %c0_6 = arith.constant 0 : index
    %6 = vector.load %arg3[%c0_5, %c0_6] : memref<8x2xf32, #tpu.memory_space<vmem>>, vector<8x2xf32>
    tpu.vector_store %arg3[%c0_5, %c0_6], %5 {strides = array<i32>} : memref<8x2xf32, #tpu.memory_space<vmem>>, vector<8x2xf32>,
    return
  }
}

</mosaic_0001>

<llo_original>
// kernel: model_forward.1
$region0: #{model_forward.1}
  #allocation0 [shape = 'u32[]', space=smem, size = 0x4, offset = 0x4, fixed_abs, tag = 'smem constant byte address 0x4 - core index']
  #allocation1 [shape = 'u32[72,128]{1,0:T(1,128)}', space=vmem, size = 0x9000, scoped, tag = 'internal scratch']
  %s0 = inlined_call_operand.vmem [shape: f32[8,32], index: 0, kind: input, shape index: {}]
  %s1 = inlined_call_operand.vmem [shape: f32[32,2], index: 1, kind: input, shape index: {}]
  %s2 = inlined_call_operand.vmem [shape: f32[1,2], index: 2, kind: input, shape index: {}]
  %s3 = inlined_call_operand.vmem [shape: f32[8,2], index: 3, kind: output, shape index: {}]
  %s4 = sld [smem:[#allocation0]]
  $region22: #{model_forward.1} parent=0
    _
  %s6 = ssub.s32 1, %s4
  %s7 = scalar_select 0, %s6, %s4
  // Predicated region
  $region2: #{model_forward.1} parent=0 // pred_check
    _
  $region3: #{model_forward.1} parent=0 // pred_check_branch
    %9 = sbr.rel (0) target = $region5
  $region4: #{model_forward.1} parent=0 // pred_region
    _
  $region5: #{model_forward.1} parent=0 // pred_fallthru
    _
  // Predicated region
  $region6: #{model_forward.1} parent=0 // pred_check
    _
  $region7: #{model_forward.1} parent=0 // pred_check_branch
    %11 = sbr.rel (0) target = $region9
  $region8: #{model_forward.1} parent=0 // pred_region
    _
  $region9: #{model_forward.1} parent=0 // pred_fallthru
    _
  // Predicated region
  $region10: #{model_forward.1} parent=0 // pred_check
    _
  $region11: #{model_forward.1} parent=0 // pred_check_branch
    %13 = sbr.rel (0) target = $region13
  $region12: #{model_forward.1} parent=0 // pred_region
    _
  $region13: #{model_forward.1} parent=0 // pred_fallthru
    _
  %v14 = vld [vmem:[%s0] sm:$0xff]
  %v15 = vld [vmem:[%s1] sm:$0xff]
  %v16 = vld [vmem:[%s1 + $0x8] sm:$0xff]
  %v17 = vld [vmem:[%s1 + $0x10] sm:$0xff]
  %v18 = vld [vmem:[%s1 + $0x18] sm:$0xff]
  %v19 = vld [vmem:[%s2] sm:$0x1]
  %v21 = vperm.slane %v19, 0
  %vm23 = vcmask 261120
  %v25 = vsel %vm23, %v14, 0
  %27 = vmatpush.msra.mxu0 0.0
  %28 = vmatpush.msra.mxu0 0.0
  %29 = vmatpush.msra.mxu0 0.0
  %30 = vmatpush.msra.mxu0 0.0
  %31 = vmatpush.msra.mxu0 0.0
  %32 = vmatpush.msra.mxu0 0.0
  %33 = vmatpush.msra.mxu0 0.0
  %34 = vmatpush.msra.mxu0 0.0
  %35 = vmatpush.msra.mxu0 0.0
  %36 = vmatpush.msra.mxu0 0.0
  %37 = vmatpush.msra.mxu0 0.0
  %38 = vmatpush.msra.mxu0 0.0
  %39 = vmatpush.msra.mxu0 %v18
  %40 = vmatpush.msra.mxu0 %v17
  %41 = vmatpush.msra.mxu0 %v16
  %42 = vmatpush.msra.mxu0 %v15
  %43 = vmatmul.f32.gmra.mxu0 %v25
  %v44 = vpop.f32.mrf.mxu0
  %v45 = vadd.f32 %v21, %v44
  %46 = vdwg.mxu0
  %vm47 = vcmask 15360
  %48 = vst.msk [vmem:[%s3] sm:$0xff] %vm47, %v45
  // Predicated region
  $region14: #{model_forward.1} parent=0 // pred_check
    _
  $region15: #{model_forward.1} parent=0 // pred_check_branch
    %50 = sbr.rel (0) target = $region17
  $region16: #{model_forward.1} parent=0 // pred_region
    _
  $region17: #{model_forward.1} parent=0 // pred_fallthru
    _
  // Predicated region
  $region18: #{model_forward.1} parent=0 // pred_check
    _
  $region19: #{model_forward.1} parent=0 // pred_check_branch
    %52 = sbr.rel (0) target = $region21
  $region20: #{model_forward.1} parent=0 // pred_region
    _
  $region21: #{model_forward.1} parent=0 // pred_fallthru
    _

</llo_original>
